<compile_context>
chip_gen: v7x
topology: tpu7x:2x2x1
jax: 0.10.0
libtpu: 0.0.40
codegen_flags: <defaults>
</compile_context>

<pallas_src>
import jax
import jax.numpy as jnp
import numpy as np
from jax.experimental import pallas as pl
from jax.experimental.pallas import tpu as pltpu


def up_with_lstm_input(x, down_output, lstm_output, params, *, num_groups=1):
  """Fused forward pass. Inputs follow PyTorch NCL layout."""
  B, Cin, L = x.shape
  _, Cd, Td = down_output.shape
  _, Cl, Ll = lstm_output.shape

  wt, bt = params["wt"], params["bt"]       # (Cin, Cup, 2), (Cup,)
  wg1, bg1 = params["wg1"], params["bg1"]   # (Cin, Cl),     (Cin,)
  wg2, bg2 = params["wg2"], params["bg2"]   # (T, Ll),       (T,)
  wc1, bc1 = params["wc1"], params["bc1"]   # (Cmid, Ctot, 3), (Cmid,)
  wc2, bc2 = params["wc2"], params["bc2"]   # (Cout, Cmid, 3), (Cout,)

  Cup = wt.shape[1]
  Cmid, Ctot = wc1.shape[0], wc1.shape[1]
  Cout = wc2.shape[0]

  # torch: diff = down_output.size(1) - x.size(1) (CHANNEL dims) applied as a
  # TIME pad -- reproduced faithfully, but checked so mismatches fail loudly.
  diff = Cd - Cup
  T = 2 * L + diff
  assert T == Td, f"time mismatch: 2*L + diff = {T} vs down_output time {Td}"
  assert Ctot == Cd + Cup, "conv_block in_channels != concat channel count"
  assert wg1.shape == (Ctot, Cl) and wg2.shape == (T, Ll) and wt.shape[0] == Cin
  assert wc2.shape[1] == Cmid

  assert B % num_groups == 0, "num_groups must divide batch"
  Ng = B // num_groups            # batches folded into one grid step
  N = Ng * T                      # lane width the kernel sees
  if num_groups > 1:
    # Partial (non-full) blocks must keep lane dims 128-aligned; with >1 group
    # the grid axis is 'parallel' so v7x can shard across its 2 TensorCores.
    assert N % 128 == 0 and (Ng * L) % 128 == 0 and (Ng * Ll) % 128 == 0, (
        "num_groups > 1 requires 128-aligned per-group lane widths")

  f32 = jnp.float32

  # ---- fold batch into the lane axis: (B, C, t) -> (C, B*t) ----
  x_f = jnp.transpose(x, (1, 0, 2)).reshape(Cin, B * L).astype(f32)
  down_f = jnp.transpose(down_output, (1, 0, 2)).reshape(Cd, B * T).astype(f32)
  lstm_f = jnp.transpose(lstm_output, (1, 0, 2)).reshape(Cl, B * Ll).astype(f32)

  # ---- structural constants (numpy, trace-time; per-group, shared by groups) ----
  p0 = diff // 2
  sel_e = np.zeros((Ng * L, N), np.float32)   # even-phase placement (+ pad offset)
  sel_o = np.zeros((Ng * L, N), np.float32)   # odd-phase placement
  for b in range(Ng):
    for l in range(L):
      sel_e[b * L + l, b * T + p0 + 2 * l] = 1.0
      sel_o[b * L + l, b * T + p0 + 2 * l + 1] = 1.0
  t_idx = np.tile(np.arange(T), Ng)
  m_prev = (t_idx != 0).astype(np.float32)[None, :]      # zero t==0 columns
  m_next = (t_idx != T - 1).astype(np.float32)[None, :]  # zero t==T-1 columns
  up_mask = sel_e.sum(0) + sel_o.sum(0)                  # 1 on non-padded up cols

  # ---- parameter-derived constants (plain JAX glue, outside the kernel) ----
  w_even = jnp.transpose(wt[:, :, 0]).astype(f32)        # (Cup, Cin)
  w_odd = jnp.transpose(wt[:, :, 1]).astype(f32)         # (Cup, Cin)
  # Block-diagonal time Linear: the per-batch Linear becomes one matmul on B*T.
  wg2_big = jnp.kron(jnp.eye(Ng, dtype=f32), wg2.T.astype(f32))   # (Ng*Ll, N)
  # All additive constants feeding h, folded into one term:
  #   bg1 pushed through the Linear, bg2, and the ConvTranspose bias restricted
  #   to the non-padded columns of the `up` half of the channel concat.
  lstm_bias = (bg1.astype(f32)[:, None] * jnp.sum(wg2_big, axis=0)[None, :]
               + jnp.tile(bg2.astype(f32), Ng)[None, :])          # (Ctot, N)
  bt_pad = bt.astype(f32)[:, None] * jnp.asarray(up_mask)[None, :]
  hbias = lstm_bias + jnp.concatenate([jnp.zeros((Cd, N), f32), bt_pad], axis=0)

  # Conv1d(k=3) weights fused to (C_out, 3*C_in + 1): [tap t-1 | t | t+1 | bias]
  wc1_aug = jnp.concatenate(
      [wc1[:, :, 0], wc1[:, :, 1], wc1[:, :, 2], bc1[:, None]], axis=1).astype(f32)
  wc2_aug = jnp.concatenate(
      [wc2[:, :, 0], wc2[:, :, 1], wc2[:, :, 2], bc2[:, None]], axis=1).astype(f32)

  # ---- pack constants into two buffers (2 weight DMAs instead of ~10) ----
  # "wide" buffer: everything with lane width N.
  wide = jnp.concatenate(
      [jnp.asarray(sel_e), jnp.asarray(sel_o), wg2_big, hbias,
       jnp.asarray(m_prev), jnp.asarray(m_next)], axis=0)
  o_sel_e = 0
  o_sel_o = o_sel_e + Ng * L
  o_wg2 = o_sel_o + Ng * L
  o_hbias = o_wg2 + Ng * Ll
  o_mprev = o_hbias + Ctot
  o_mnext = o_mprev + 1
  r_wide = o_mnext + 1

  # "narrow" buffer: channel-sized weights, right-padded to a common width.
  nar_w = max(Cin, Cl, 3 * Ctot + 1, 3 * Cmid + 1)

  def pad_w(a):
    return jnp.pad(a, ((0, 0), (0, nar_w - a.shape[1])))

  narrow = jnp.concatenate(
      [pad_w(w_even), pad_w(w_odd), pad_w(wg1.astype(f32)),
       pad_w(wc1_aug), pad_w(wc2_aug)], axis=0)
  n_we = 0
  n_wo = n_we + Cup
  n_wg1 = n_wo + Cup
  n_wc1 = n_wg1 + Ctot
  n_wc2 = n_wc1 + Cmid
  r_nar = n_wc2 + Cout

  def kernel(x_ref, down_ref, lstm_ref, wide_ref, nar_ref, o_ref):
    xg = x_ref[...]         # (Cin, Ng*L)
    down = down_ref[...]    # (Cd, N)
    lstm = lstm_ref[...]    # (Cl, Ng*Ll)
    wide_c = wide_ref[...]  # packed wide constants
    nar_c = nar_ref[...]    # packed narrow weights

    sel_e_ = wide_c[o_sel_e:o_sel_e + Ng * L, :]
    sel_o_ = wide_c[o_sel_o:o_sel_o + Ng * L, :]
    wg2b = wide_c[o_wg2:o_wg2 + Ng * Ll, :]
    hb = wide_c[o_hbias:o_hbias + Ctot, :]
    mp = wide_c[o_mprev:o_mprev + 1, :]
    mn = wide_c[o_mnext:o_mnext + 1, :]

    we = nar_c[n_we:n_we + Cup, 0:Cin]
    wo = nar_c[n_wo:n_wo + Cup, 0:Cin]
    wg1_ = nar_c[n_wg1:n_wg1 + Ctot, 0:Cl]
    wc1_ = nar_c[n_wc1:n_wc1 + Cmid, 0:3 * Ctot + 1]
    wc2_ = nar_c[n_wc2:n_wc2 + Cout, 0:3 * Cmid + 1]

    # Glue1D: 1x1 conv over channels + per-batch Linear over time (block-diag).
    lstm_mm = jnp.dot(jnp.dot(wg1_, lstm, preferred_element_type=f32), wg2b,
                      preferred_element_type=f32)                    # (Ctot, N)

    # ConvTranspose1d(k=2, s=2) + F.pad: even/odd matmuls placed by the
    # precomputed 0/1 matrices (interleave + time pad in one placement step).
    up = (jnp.dot(jnp.dot(we, xg, preferred_element_type=f32), sel_e_,
                  preferred_element_type=f32)
          + jnp.dot(jnp.dot(wo, xg, preferred_element_type=f32), sel_o_,
                    preferred_element_type=f32))                     # (Cup, N)

    # channel concat + every additive constant in a single add
    h = jnp.concatenate([down, up], axis=0) + lstm_mm + hb           # (Ctot, N)

    ones_row = jnp.ones((1, N), f32)

    def conv3_relu(inp, w_aug):
      # Conv1d(k=3, pad=1) as ONE matmul with K = 3*C + 1 (bias via ones row).
      # The +-1 time shifts use pad+slice (robust lowering at these small,
      # non-128-aligned lane widths; pltpu.roll(+-1)+mask is the XLU
      # alternative); batch-boundary columns are zeroed by the lane masks.
      n = inp.shape[1]
      padded = jnp.pad(inp, ((0, 0), (1, 1)))
      left = padded[:, 0:n] * mp         # inp[:, t-1], zero at t == 0
      right = padded[:, 2:n + 2] * mn    # inp[:, t+1], zero at t == T-1
      stacked = jnp.concatenate([left, inp, right, ones_row], axis=0)
      return jnp.maximum(
          jnp.dot(w_aug, stacked, preferred_element_type=f32), 0.0)

    h1 = conv3_relu(h, wc1_)             # (Cmid, N)
    h2 = conv3_relu(h1, wc2_)            # (Cout, N)
    o_ref[...] = h2.astype(o_ref.dtype)

  out_f = pl.pallas_call(
      kernel,
      out_shape=jax.ShapeDtypeStruct((Cout, B * T), x.dtype),
      grid_spec=pltpu.PrefetchScalarGridSpec(
          num_scalar_prefetch=0,
          grid=(num_groups,),
          in_specs=[
              pl.BlockSpec((Cin, Ng * L), lambda g: (0, g)),
              pl.BlockSpec((Cd, N), lambda g: (0, g)),
              pl.BlockSpec((Cl, Ng * Ll), lambda g: (0, g)),
              pl.BlockSpec((r_wide, N), lambda g: (0, 0)),
              pl.BlockSpec((r_nar, nar_w), lambda g: (0, 0)),
          ],
          out_specs=pl.BlockSpec((Cout, N), lambda g: (0, g)),
      ),
      compiler_params=pltpu.CompilerParams(
          dimension_semantics=("parallel",)),
  )(x_f, down_f, lstm_f, wide, narrow)

  # unfold: (Cout, B*T) -> (B, Cout, T)
  return jnp.transpose(out_f.reshape(Cout, B, T), (1, 0, 2)).astype(x.dtype)


def _reference(x, down, lstm, p):
  """Pure-JAX reference for correctness checking."""
  g = jnp.einsum("oc,bcl->bol", p["wg1"], lstm) + p["bg1"][None, :, None]
  lstm_norm = jnp.einsum("bol,tl->bot", g, p["wg2"]) + p["bg2"][None, None, :]
  even = jnp.einsum("io,bil->bol", p["wt"][:, :, 0], x)
  odd = jnp.einsum("io,bil->bol", p["wt"][:, :, 1], x)
  up = jnp.stack([even, odd], axis=-1).reshape(x.shape[0], p["wt"].shape[1], 2 * x.shape[2])
  up = up + p["bt"][None, :, None]
  diff = down.shape[1] - up.shape[1]
  up = jnp.pad(up, ((0, 0), (0, 0), (diff // 2, diff - diff // 2)))
  h = jnp.concatenate([down, up], axis=1) + lstm_norm

  def conv3(inp, w, b):
    T = inp.shape[2]
    hp = jnp.pad(inp, ((0, 0), (0, 0), (1, 1)))
    acc = sum(jnp.einsum("oi,bit->bot", w[:, :, k], hp[:, :, k:k + T]) for k in range(3))
    return acc + b[None, :, None]

  h1 = jax.nn.relu(conv3(h, p["wc1"], p["bc1"]))
  h2 = jax.nn.relu(conv3(h1, p["wc2"], p["bc2"]))
  return h2


if __name__ == "__main__":
  # Module constructor analogue (determines derived sizes):
  #   in_channels=8, out_channels=4, layer_sizes=[1, 8, 16, 32], layer_num=0,
  #   lstm_out_sample_size=8, samples_per_batch=64
  #   -> max_layer_size=32, first_up_layer_sample_size=64//8=8, in_sample_size=16
  B = 2
  Cin = 8
  Cout = 4
  max_layer_size = 32
  lstm_out_sample_size = 8
  in_sample_size = 16            # time length after the transposed conv
  L = in_sample_size // 2        # input time length for x

  key = jax.random.PRNGKey(0)
  ks = jax.random.split(key, 16)

  def init(k, shape, scale=0.1):
    return (scale * jax.random.normal(k, shape)).astype(jnp.float32)

  params = {
      # nn.ConvTranspose1d(Cin, Cin//2, kernel_size=2, stride=2): weight (Cin, Cin//2, 2)
      "wt": init(ks[0], (Cin, Cin // 2, 2)),
      "bt": init(ks[1], (Cin // 2,)),
      # Glue1D: Conv1d(max_layer_size -> Cin, k=1) + Linear(lstm_out_sample_size -> in_sample_size)
      "wg1": init(ks[2], (Cin, max_layer_size)),
      "bg1": init(ks[3], (Cin,)),
      "wg2": init(ks[4], (in_sample_size, lstm_out_sample_size)),
      "bg2": init(ks[5], (in_sample_size,)),
      # ConvBlock1D: Conv1d(Cin -> Cout, k=3, pad=1) + ReLU, Conv1d(Cout -> Cout, k=3, pad=1) + ReLU
      "wc1": init(ks[6], (Cout, Cin, 3)),
      "bc1": init(ks[7], (Cout,)),
      "wc2": init(ks[8], (Cout, Cout, 3)),
      "bc2": init(ks[9], (Cout,)),
  }

  x = init(ks[10], (B, Cin, L), scale=1.0)
  down_output = init(ks[11], (B, Cin // 2, in_sample_size), scale=1.0)
  lstm_output = init(ks[12], (B, max_layer_size, lstm_out_sample_size), scale=1.0)

  out = up_with_lstm_input(x, down_output, lstm_output, params)
  out = jax.block_until_ready(out)

  ref = _reference(x, down_output, lstm_output, params)
  np.testing.assert_allclose(np.asarray(out), np.asarray(ref), rtol=1e-4, atol=1e-5)

  print("KERNEL_OK")
</pallas_src>

<mosaic_0001>
module attributes {stable_mosaic.version = 11 : i64} {
  func.func @kernel(%arg0: i32, %arg1: memref<8x16xf32, #tpu.memory_space<vmem>>, %arg2: memref<4x32xf32, #tpu.memory_space<vmem>>, %arg3: memref<32x16xf32, #tpu.memory_space<vmem>>, %arg4: memref<58x32xf32, #tpu.memory_space<vmem>>, %arg5: memref<24x32xf32, #tpu.memory_space<vmem>>, %arg6: memref<4x32xf32, #tpu.memory_space<vmem>>) attributes {dimension_semantics = [#tpu.dimension_semantics<parallel>], iteration_bounds = array<i64: 1>, scalar_prefetch = 0 : i64, scratch_operands = 0 : i64, tpu.core_type = #tpu.core_type<tc>, window_params = [{transform_indices = @transform_0, window_bounds = array<i64: 8, 16>}, {transform_indices = @transform_1, window_bounds = array<i64: 4, 32>}, {transform_indices = @transform_2, window_bounds = array<i64: 32, 16>}, {pipeline_mode = #tpu.pipeline_mode<synchronous>, transform_indices = @transform_3, window_bounds = array<i64: 58, 32>}, {pipeline_mode = #tpu.pipeline_mode<synchronous>, transform_indices = @transform_4, window_bounds = array<i64: 24, 32>}, {transform_indices = @transform_5, window_bounds = array<i64: 4, 32>}]} {
    %c0 = arith.constant 0 : index
    %c0_0 = arith.constant 0 : index
    %0 = vector.load %arg1[%c0, %c0_0] : memref<8x16xf32, #tpu.memory_space<vmem>>, vector<8x16xf32>
    %c0_1 = arith.constant 0 : index
    %c0_2 = arith.constant 0 : index
    %1 = vector.load %arg2[%c0_1, %c0_2] : memref<4x32xf32, #tpu.memory_space<vmem>>, vector<4x32xf32>
    %c0_3 = arith.constant 0 : index
    %c0_4 = arith.constant 0 : index
    %2 = vector.load %arg3[%c0_3, %c0_4] : memref<32x16xf32, #tpu.memory_space<vmem>>, vector<32x16xf32>
    %c0_5 = arith.constant 0 : index
    %c0_6 = arith.constant 0 : index
    %3 = vector.load %arg4[%c0_5, %c0_6] : memref<58x32xf32, #tpu.memory_space<vmem>>, vector<58x32xf32>
    %c0_7 = arith.constant 0 : index
    %c0_8 = arith.constant 0 : index
    %4 = vector.load %arg5[%c0_7, %c0_8] : memref<24x32xf32, #tpu.memory_space<vmem>>, vector<24x32xf32>
    %5 = vector.extract_strided_slice %3 {offsets = [0, 0], sizes = [16, 32], strides = [1, 1]} : vector<58x32xf32> to vector<16x32xf32>
    %6 = vector.extract_strided_slice %3 {offsets = [16, 0], sizes = [16, 32], strides = [1, 1]} : vector<58x32xf32> to vector<16x32xf32>
    %7 = vector.extract_strided_slice %3 {offsets = [32, 0], sizes = [16, 32], strides = [1, 1]} : vector<58x32xf32> to vector<16x32xf32>
    %8 = vector.extract_strided_slice %3 {offsets = [48, 0], sizes = [8, 32], strides = [1, 1]} : vector<58x32xf32> to vector<8x32xf32>
    %9 = vector.extract_strided_slice %3 {offsets = [56, 0], sizes = [1, 32], strides = [1, 1]} : vector<58x32xf32> to vector<1x32xf32>
    %10 = vector.extract_strided_slice %3 {offsets = [57, 0], sizes = [1, 32], strides = [1, 1]} : vector<58x32xf32> to vector<1x32xf32>
    %11 = vector.extract_strided_slice %4 {offsets = [0, 0], sizes = [4, 8], strides = [1, 1]} : vector<24x32xf32> to vector<4x8xf32>
    %12 = vector.extract_strided_slice %4 {offsets = [4, 0], sizes = [4, 8], strides = [1, 1]} : vector<24x32xf32> to vector<4x8xf32>
    %13 = vector.extract_strided_slice %4 {offsets = [8, 0], sizes = [8, 32], strides = [1, 1]} : vector<24x32xf32> to vector<8x32xf32>
    %14 = vector.extract_strided_slice %4 {offsets = [16, 0], sizes = [4, 25], strides = [1, 1]} : vector<24x32xf32> to vector<4x25xf32>
    %15 = vector.extract_strided_slice %4 {offsets = [20, 0], sizes = [4, 13], strides = [1, 1]} : vector<24x32xf32> to vector<4x13xf32>
    %cst = arith.constant dense<0.000000e+00> : vector<8x16xf32>
    %16 = tpu.matmul %13, %2, %cst {dimension_numbers = #tpu.dot_dimension_numbers<[1], [0], [0], [1], [0, 0, 1, 1], [], []>} : vector<8x32xf32>, vector<32x16xf32>, vector<8x16xf32> -> vector<8x16xf32>
    %cst_9 = arith.constant dense<0.000000e+00> : vector<8x32xf32>
    %17 = tpu.matmul %16, %7, %cst_9 {dimension_numbers = #tpu.dot_dimension_numbers<[1], [0], [0], [1], [0, 0, 1, 1], [], []>} : vector<8x16xf32>, vector<16x32xf32>, vector<8x32xf32> -> vector<8x32xf32>
    %cst_10 = arith.constant dense<0.000000e+00> : vector<4x16xf32>
    %18 = tpu.matmul %11, %0, %cst_10 {dimension_numbers = #tpu.dot_dimension_numbers<[1], [0], [0], [1], [0, 0, 1, 1], [], []>} : vector<4x8xf32>, vector<8x16xf32>, vector<4x16xf32> -> vector<4x16xf32>
    %cst_11 = arith.constant dense<0.000000e+00> : vector<4x32xf32>
    %19 = tpu.matmul %18, %5, %cst_11 {dimension_numbers = #tpu.dot_dimension_numbers<[1], [0], [0], [1], [0, 0, 1, 1], [], []>} : vector<4x16xf32>, vector<16x32xf32>, vector<4x32xf32> -> vector<4x32xf32>
    %cst_12 = arith.constant dense<0.000000e+00> : vector<4x16xf32>
    %20 = tpu.matmul %12, %0, %cst_12 {dimension_numbers = #tpu.dot_dimension_numbers<[1], [0], [0], [1], [0, 0, 1, 1], [], []>} : vector<4x8xf32>, vector<8x16xf32>, vector<4x16xf32> -> vector<4x16xf32>
    %cst_13 = arith.constant dense<0.000000e+00> : vector<4x32xf32>
    %21 = tpu.matmul %20, %6, %cst_13 {dimension_numbers = #tpu.dot_dimension_numbers<[1], [0], [0], [1], [0, 0, 1, 1], [], []>} : vector<4x16xf32>, vector<16x32xf32>, vector<4x32xf32> -> vector<4x32xf32>
    %22 = arith.addf %19, %21 : vector<4x32xf32>
    %23 = tpu.concatenate %1, %22 in 0 : vector<4x32xf32>, vector<4x32xf32> -> vector<8x32xf32>
    %24 = arith.addf %23, %17 : vector<8x32xf32>
    %25 = arith.addf %24, %8 : vector<8x32xf32>
    %cst_14 = arith.constant 1.000000e+00 : f32
    %26 = vector.broadcast %cst_14 : f32 to vector<1x32xf32>
    %c0_i32 = arith.constant 0 : i32
    %27 = arith.sitofp %c0_i32 : i32 to f32
    %28 = vector.broadcast %27 : f32 to vector<8x1xf32>
    %29 = tpu.concatenate %28, %25 in 1 : vector<8x1xf32>, vector<8x32xf32> -> vector<8x33xf32>
    %30 = vector.broadcast %27 : f32 to vector<8x1xf32>
    %31 = tpu.concatenate %29, %30 in 1 : vector<8x33xf32>, vector<8x1xf32> -> vector<8x34xf32>
    %32 = vector.extract_strided_slice %31 {offsets = [0, 0], sizes = [8, 32], strides = [1, 1]} : vector<8x34xf32> to vector<8x32xf32>
    %33 = vector.broadcast %9 : vector<1x32xf32> to vector<8x32xf32>
    %34 = arith.mulf %32, %33 : vector<8x32xf32>
    %35 = vector.extract_strided_slice %31 {offsets = [0, 2], sizes = [8, 32], strides = [1, 1]} : vector<8x34xf32> to vector<8x32xf32>
    %36 = vector.broadcast %10 : vector<1x32xf32> to vector<8x32xf32>
    %37 = arith.mulf %35, %36 : vector<8x32xf32>
    %38 = tpu.concatenate %34, %25, %37, %26 in 0 : vector<8x32xf32>, vector<8x32xf32>, vector<8x32xf32>, vector<1x32xf32> -> vector<25x32xf32>
    %cst_15 = arith.constant dense<0.000000e+00> : vector<4x32xf32>
    %39 = tpu.matmul %14, %38, %cst_15 {dimension_numbers = #tpu.dot_dimension_numbers<[1], [0], [0], [1], [0, 0, 1, 1], [], []>} : vector<4x25xf32>, vector<25x32xf32>, vector<4x32xf32> -> vector<4x32xf32>
    %cst_16 = arith.constant 0.000000e+00 : f32
    %40 = vector.broadcast %cst_16 : f32 to vector<4x32xf32>
    %41 = arith.maximumf %39, %40 : vector<4x32xf32>
    %c0_i32_17 = arith.constant 0 : i32
    %42 = arith.sitofp %c0_i32_17 : i32 to f32
    %43 = vector.broadcast %42 : f32 to vector<4x1xf32>
    %44 = tpu.concatenate %43, %41 in 1 : vector<4x1xf32>, vector<4x32xf32> -> vector<4x33xf32>
    %45 = vector.broadcast %42 : f32 to vector<4x1xf32>
    %46 = tpu.concatenate %44, %45 in 1 : vector<4x33xf32>, vector<4x1xf32> -> vector<4x34xf32>
    %47 = vector.extract_strided_slice %46 {offsets = [0, 0], sizes = [4, 32], strides = [1, 1]} : vector<4x34xf32> to vector<4x32xf32>
    %48 = vector.broadcast %9 : vector<1x32xf32> to vector<4x32xf32>
    %49 = arith.mulf %47, %48 : vector<4x32xf32>
    %50 = vector.extract_strided_slice %46 {offsets = [0, 2], sizes = [4, 32], strides = [1, 1]} : vector<4x34xf32> to vector<4x32xf32>
    %51 = vector.broadcast %10 : vector<1x32xf32> to vector<4x32xf32>
    %52 = arith.mulf %50, %51 : vector<4x32xf32>
    %53 = tpu.concatenate %49, %41, %52, %26 in 0 : vector<4x32xf32>, vector<4x32xf32>, vector<4x32xf32>, vector<1x32xf32> -> vector<13x32xf32>
    %cst_18 = arith.constant dense<0.000000e+00> : vector<4x32xf32>
    %54 = tpu.matmul %15, %53, %cst_18 {dimension_numbers = #tpu.dot_dimension_numbers<[1], [0], [0], [1], [0, 0, 1, 1], [], []>} : vector<4x13xf32>, vector<13x32xf32>, vector<4x32xf32> -> vector<4x32xf32>
    %cst_19 = arith.constant 0.000000e+00 : f32
    %55 = vector.broadcast %cst_19 : f32 to vector<4x32xf32>
    %56 = arith.maximumf %54, %55 : vector<4x32xf32>
    %c0_20 = arith.constant 0 : index
    %c0_21 = arith.constant 0 : index
    %57 = vector.load %arg6[%c0_20, %c0_21] : memref<4x32xf32, #tpu.memory_space<vmem>>, vector<4x32xf32>
    tpu.vector_store %arg6[%c0_20, %c0_21], %56 {strides = array<i32>} : memref<4x32xf32, #tpu.memory_space<vmem>>, vector<4x32xf32>,
    return
  }
  func.func @transform_0(%arg0: i32) -> (i32, i32) {
    %c0_i32 = arith.constant 0 : i32
    %c0_i32_0 = arith.constant 0 : i32
    return %c0_i32, %arg0 : i32, i32
  }
  func.func @transform_1(%arg0: i32) -> (i32, i32) {
    %c0_i32 = arith.constant 0 : i32
    %c0_i32_0 = arith.constant 0 : i32
    return %c0_i32, %arg0 : i32, i32
  }
  func.func @transform_2(%arg0: i32) -> (i32, i32) {
    %c0_i32 = arith.constant 0 : i32
    %c0_i32_0 = arith.constant 0 : i32
    return %c0_i32, %arg0 : i32, i32
  }
  func.func @transform_3(%arg0: i32) -> (i32, i32) {
    %c0_i32 = arith.constant 0 : i32
    %c0_i32_0 = arith.constant 0 : i32
    %c0_i32_1 = arith.constant 0 : i32
    return %c0_i32, %c0_i32_0 : i32, i32
  }
  func.func @transform_4(%arg0: i32) -> (i32, i32) {
    %c0_i32 = arith.constant 0 : i32
    %c0_i32_0 = arith.constant 0 : i32
    %c0_i32_1 = arith.constant 0 : i32
    return %c0_i32, %c0_i32_0 : i32, i32
  }
  func.func @transform_5(%arg0: i32) -> (i32, i32) {
    %c0_i32 = arith.constant 0 : i32
    %c0_i32_0 = arith.constant 0 : i32
    return %c0_i32, %arg0 : i32, i32
  }
}

</mosaic_0001>

<llo_original>
// kernel: tpu_custom_call.1
$region0: #{tpu_custom_call.1}
  #allocation0 [shape = 'u32[]', space=smem, size = 0x4, offset = 0x4, fixed_abs, tag = 'smem constant byte address 0x4 - core index']
  #allocation1 [shape = 'u32[144,128]{1,0:T(1,128)}', space=vmem, size = 0x12000, scoped, tag = 'internal scratch']
  %s0 = inlined_call_operand.vmem [shape: f32[8,16], index: 0, kind: input, shape index: {}]
  %s1 = inlined_call_operand.vmem [shape: f32[4,32], index: 1, kind: input, shape index: {}]
  %s2 = inlined_call_operand.vmem [shape: f32[32,16], index: 2, kind: input, shape index: {}]
  %s3 = inlined_call_operand.vmem [shape: f32[58,32], index: 3, kind: input, shape index: {}]
  %s4 = inlined_call_operand.vmem [shape: f32[24,32], index: 4, kind: input, shape index: {}]
  %s5 = inlined_call_operand.hbm [shape: f32[4,32], index: 5, kind: output, shape index: {}]
  %s6 = sld [smem:[#allocation0]]
  $region30: #{tpu_custom_call.1} parent=0
    _
  %s8 = ssub.s32 1, %s6
  %s9 = scalar_select 0, %s8, %s6
  $region1: #{tpu_custom_call.1} parent=0
    #allocation2 [shape = 'u8[2048]{0}', space=vmem, size = 0x800, scoped, tag = 'output window, operand 0, single buffered']
    #allocation3 [shape = 's32[1]{0}', space=sflag, size = 0x4, scoped, tag = 'scoped memory for tpu_custom_call.1']
    %10 = vsyncpa [#allocation3], 0
    // Predicated region
    $region2: #{tpu_custom_call.1} parent=1 // pred_check
      _
    $region3: #{tpu_custom_call.1} parent=1 // pred_check_branch
      %12 = sbr.rel (0) target = $region5
    $region4: #{tpu_custom_call.1} parent=1 // pred_region
      _
    $region5: #{tpu_custom_call.1} parent=1 // pred_fallthru
      _
    // Predicated region
    $region6: #{tpu_custom_call.1} parent=1 // pred_check
      _
    $region7: #{tpu_custom_call.1} parent=1 // pred_check_branch
      %14 = sbr.rel (0) target = $region9
    $region8: #{tpu_custom_call.1} parent=1 // pred_region
      _
    $region9: #{tpu_custom_call.1} parent=1 // pred_fallthru
      _
    // Predicated region
    $region10: #{tpu_custom_call.1} parent=1 // pred_check
      _
    $region11: #{tpu_custom_call.1} parent=1 // pred_check_branch
      %16 = sbr.rel (0) target = $region13
    $region12: #{tpu_custom_call.1} parent=1 // pred_region
      _
    $region13: #{tpu_custom_call.1} parent=1 // pred_fallthru
      _
    // Predicated region
    $region14: #{tpu_custom_call.1} parent=1 // pred_check
      _
    $region15: #{tpu_custom_call.1} parent=1 // pred_check_branch
      %18 = sbr.rel (0) target = $region17
    $region16: #{tpu_custom_call.1} parent=1 // pred_region
      _
    $region17: #{tpu_custom_call.1} parent=1 // pred_fallthru
      _
    // Predicated region
    $region18: #{tpu_custom_call.1} parent=1 // pred_check
      _
    $region19: #{tpu_custom_call.1} parent=1 // pred_check_branch
      %20 = sbr.rel (0) target = $region21
    $region20: #{tpu_custom_call.1} parent=1 // pred_region
      _
    $region21: #{tpu_custom_call.1} parent=1 // pred_fallthru
      _
    %v21 = vld [vmem:[%s0] sm:$0xff]
    %v22 = vld [vmem:[%s1] sm:$0xf]
    %v23 = vld [vmem:[%s2] sm:$0xff]
    %v24 = vld [vmem:[%s2 + $0x8] sm:$0xff]
    %v25 = vld [vmem:[%s2 + $0x10] sm:$0xff]
    %v26 = vld [vmem:[%s2 + $0x18] sm:$0xff]
    %v27 = vld [vmem:[%s3] sm:$0xff]
    %v28 = vld [vmem:[%s3 + $0x8] sm:$0xff]
    %v29 = vld [vmem:[%s3 + $0x10] sm:$0xff]
    %v30 = vld [vmem:[%s3 + $0x18] sm:$0xff]
    %v31 = vld [vmem:[%s3 + $0x20] sm:$0xff]
    %v32 = vld [vmem:[%s3 + $0x28] sm:$0xff]
    %v33 = vld [vmem:[%s3 + $0x30] sm:$0xff]
    %v34 = vld [vmem:[%s3 + $0x38] sm:$0x3]
    %v35 = vld [vmem:[%s4] sm:$0xff]
    %v36 = vld [vmem:[%s4 + $0x8] sm:$0xff]
    %v37 = vld [vmem:[%s4 + $0x10] sm:$0xff]
    %vm38 = vcmask 261120
    %v40 = vsel %vm38, %v36, 0
    %42 = vmatprep.subr.mxu0 0.0
    %43 = vmatpush1.msra.mxu0 %v23
    %44 = vmatprep.subr.mxu0 0.0
    %45 = vmatpush1.msra.mxu0 %v24
    %46 = vmatprep.subr.mxu0 0.0
    %47 = vmatpush1.msra.mxu0 %v25
    %48 = vmatprep.subr.mxu0 0.0
    %49 = vmatpush1.msra.mxu0 %v26
    %50 = vmatprep.subr.mxu0 0.0
    %51 = vmatpush1.msra.mxu0 0.0
    %52 = vmatprep.subr.mxu0 0.0
    %53 = vmatpush1.msra.mxu0 0.0
    %54 = vmatprep.subr.mxu0 0.0
    %55 = vmatpush1.msra.mxu0 0.0
    %56 = vmatprep.subr.mxu0 0.0
    %57 = vmatpush1.msra.mxu0 0.0
    %58 = vmatprep.subr.mxu0 0.0
    %59 = vmatpush1.msra.mxu0 0.0
    %60 = vmatprep.subr.mxu0 0.0
    %61 = vmatpush1.msra.mxu0 0.0
    %62 = vmatprep.subr.mxu0 0.0
    %63 = vmatpush1.msra.mxu0 0.0
    %64 = vmatprep.subr.mxu0 0.0
    %65 = vmatpush1.msra.mxu0 0.0
    %66 = vmatprep.subr.mxu0 0.0
    %67 = vmatpush1.msra.mxu0 0.0
    %68 = vmatprep.subr.mxu0 0.0
    %69 = vmatpush1.msra.mxu0 0.0
    %70 = vmatprep.subr.mxu0 0.0
    %71 = vmatpush1.msra.mxu0 0.0
    %72 = vmatprep.subr.mxu0 0.0
    %73 = vmatpush1.msra.mxu0 0.0
    %74 = vmatprep.subr.mxu0 0.0
    %75 = vmatpush1.msra.mxu0 0.0
    %76 = vmatprep.subr.mxu0 0.0
    %77 = vmatpush1.msra.mxu0 0.0
    %78 = vmatprep.subr.mxu0 0.0
    %79 = vmatpush1.msra.mxu0 0.0
    %80 = vmatprep.subr.mxu0 0.0
    %81 = vmatpush1.msra.mxu0 0.0
    %82 = vmatprep.subr.mxu0 0.0
    %83 = vmatpush1.msra.mxu0 0.0
    %84 = vmatprep.subr.mxu0 0.0
    %85 = vmatpush1.msra.mxu0 0.0
    %86 = vmatprep.subr.mxu0 0.0
    %87 = vmatpush1.msra.mxu0 0.0
    %88 = vmatprep.subr.mxu0 0.0
    %89 = vmatpush1.msra.mxu0 0.0
    %90 = vmatprep.subr.mxu0 0.0
    %91 = vmatpush1.msra.mxu0 0.0
    %92 = vmatprep.subr.mxu0 0.0
    %93 = vmatpush1.msra.mxu0 0.0
    %94 = vmatprep.subr.mxu0 0.0
    %95 = vmatpush1.msra.mxu0 0.0
    %96 = vmatprep.subr.mxu0 0.0
    %97 = vmatpush1.msra.mxu0 0.0
    %98 = vmatprep.subr.mxu0 0.0
    %99 = vmatpush1.msra.mxu0 0.0
    %100 = vmatprep.subr.mxu0 0.0
    %101 = vmatpush1.msra.mxu0 0.0
    %102 = vmatprep.subr.mxu0 0.0
    %103 = vmatpush1.msra.mxu0 0.0
    %104 = vmatprep.subr.mxu0 0.0
    %105 = vmatpush1.msra.mxu0 0.0
    %106 = vmatprep.mubr.f32.mxu0 0.0
    %107 = vmatmul.mubr.f32.gmra.mrb[0].mxu0 %v40
    %v108 = vpop.f32.mrb[0].mxu0
    %v109 = vadd.f32 0.0, %v108
    %v110 = vpop.f32.mrb[0].mxu0
    %111 = vdwg.mxu0
    %vm112 = vcmask 130048
    %v114 = vsel %vm112, %v109, 0
    %116 = vmatprep.subr.mxu0 0.0
    %117 = vmatpush1.msra.mxu0 %v31
    %118 = vmatprep.subr.mxu0 0.0
    %119 = vmatpush1.msra.mxu0 %v32
    %120 = vmatprep.subr.mxu0 0.0
    %121 = vmatpush1.msra.mxu0 0.0
    %122 = vmatprep.subr.mxu0 0.0
    %123 = vmatpush1.msra.mxu0 0.0
    %124 = vmatprep.subr.mxu0 0.0
    %125 = vmatpush1.msra.mxu0 0.0
    %126 = vmatprep.subr.mxu0 0.0
    %127 = vmatpush1.msra.mxu0 0.0
    %128 = vmatprep.subr.mxu0 0.0
    %129 = vmatpush1.msra.mxu0 0.0
    %130 = vmatprep.subr.mxu0 0.0
    %131 = vmatpush1.msra.mxu0 0.0
    %132 = vmatprep.subr.mxu0 0.0
    %133 = vmatpush1.msra.mxu0 0.0
    %134 = vmatprep.subr.mxu0 0.0
    %135 = vmatpush1.msra.mxu0 0.0
    %136 = vmatprep.subr.mxu0 0.0
    %137 = vmatpush1.msra.mxu0 0.0
    %138 = vmatprep.subr.mxu0 0.0
    %139 = vmatpush1.msra.mxu0 0.0
    %140 = vmatprep.subr.mxu0 0.0
    %141 = vmatpush1.msra.mxu0 0.0
    %142 = vmatprep.subr.mxu0 0.0
    %143 = vmatpush1.msra.mxu0 0.0
    %144 = vmatprep.subr.mxu0 0.0
    %145 = vmatpush1.msra.mxu0 0.0
    %146 = vmatprep.subr.mxu0 0.0
    %147 = vmatpush1.msra.mxu0 0.0
    %148 = vmatprep.subr.mxu0 0.0
    %149 = vmatpush1.msra.mxu0 0.0
    %150 = vmatprep.subr.mxu0 0.0
    %151 = vmatpush1.msra.mxu0 0.0
    %152 = vmatprep.subr.mxu0 0.0
    %153 = vmatpush1.msra.mxu0 0.0
    %154 = vmatprep.subr.mxu0 0.0
    %155 = vmatpush1.msra.mxu0 0.0
    %156 = vmatprep.subr.mxu0 0.0
    %157 = vmatpush1.msra.mxu0 0.0
    %158 = vmatprep.subr.mxu0 0.0
    %159 = vmatpush1.msra.mxu0 0.0
    %160 = vmatprep.subr.mxu0 0.0
    %161 = vmatpush1.msra.mxu0 0.0
    %162 = vmatprep.subr.mxu0 0.0
    %163 = vmatpush1.msra.mxu0 0.0
    %164 = vmatprep.subr.mxu0 0.0
    %165 = vmatpush1.msra.mxu0 0.0
    %166 = vmatprep.subr.mxu0 0.0
    %167 = vmatpush1.msra.mxu0 0.0
    %168 = vmatprep.subr.mxu0 0.0
    %169 = vmatpush1.msra.mxu0 0.0
    %170 = vmatprep.subr.mxu0 0.0
    %171 = vmatpush1.msra.mxu0 0.0
    %172 = vmatprep.subr.mxu0 0.0
    %173 = vmatpush1.msra.mxu0 0.0
    %174 = vmatprep.subr.mxu0 0.0
    %175 = vmatpush1.msra.mxu0 0.0
    %176 = vmatprep.subr.mxu0 0.0
    %177 = vmatpush1.msra.mxu0 0.0
    %178 = vmatprep.subr.mxu0 0.0
    %179 = vmatpush1.msra.mxu0 0.0
    %180 = vmatprep.mubr.f32.mxu0 0.0
    %181 = vmatmul.mubr.f32.gmra.mrb[0].mxu0 %v114
    %v182 = vpop.f32.mrb[0].mxu0
    %v183 = vadd.f32 0.0, %v182
    %v184 = vpop.f32.mrb[0].mxu0
    %185 = vdwg.mxu0
    %vm186 = vcmask 64512
    %v188 = vsel %vm186, %v35, 0
    %190 = vmatprep.subr.mxu0 0.0
    %191 = vmatpush1.msra.mxu0 %v21
    %192 = vmatprep.subr.mxu0 0.0
    %193 = vmatpush1.msra.mxu0 0.0
    %194 = vmatprep.subr.mxu0 0.0
    %195 = vmatpush1.msra.mxu0 0.0
    %196 = vmatprep.subr.mxu0 0.0
    %197 = vmatpush1.msra.mxu0 0.0
    %198 = vmatprep.subr.mxu0 0.0
    %199 = vmatpush1.msra.mxu0 0.0
    %200 = vmatprep.subr.mxu0 0.0
    %201 = vmatpush1.msra.mxu0 0.0
    %202 = vmatprep.subr.mxu0 0.0
    %203 = vmatpush1.msra.mxu0 0.0
    %204 = vmatprep.subr.mxu0 0.0
    %205 = vmatpush1.msra.mxu0 0.0
    %206 = vmatprep.subr.mxu0 0.0
    %207 = vmatpush1.msra.mxu0 0.0
    %208 = vmatprep.subr.mxu0 0.0
    %209 = vmatpush1.msra.mxu0 0.0
    %210 = vmatprep.subr.mxu0 0.0
    %211 = vmatpush1.msra.mxu0 0.0
    %212 = vmatprep.subr.mxu0 0.0
    %213 = vmatpush1.msra.mxu0 0.0
    %214 = vmatprep.subr.mxu0 0.0
    %215 = vmatpush1.msra.mxu0 0.0
    %216 = vmatprep.subr.mxu0 0.0
    %217 = vmatpush1.msra.mxu0 0.0
    %218 = vmatprep.subr.mxu0 0.0
    %219 = vmatpush1.msra.mxu0 0.0
    %220 = vmatprep.subr.mxu0 0.0
    %221 = vmatpush1.msra.mxu0 0.0
    %222 = vmatprep.subr.mxu0 0.0
    %223 = vmatpush1.msra.mxu0 0.0
    %224 = vmatprep.subr.mxu0 0.0
    %225 = vmatpush1.msra.mxu0 0.0
    %226 = vmatprep.subr.mxu0 0.0
    %227 = vmatpush1.msra.mxu0 0.0
    %228 = vmatprep.subr.mxu0 0.0
    %229 = vmatpush1.msra.mxu0 0.0
    %230 = vmatprep.subr.mxu0 0.0
    %231 = vmatpush1.msra.mxu0 0.0
    %232 = vmatprep.subr.mxu0 0.0
    %233 = vmatpush1.msra.mxu0 0.0
    %234 = vmatprep.subr.mxu0 0.0
    %235 = vmatpush1.msra.mxu0 0.0
    %236 = vmatprep.subr.mxu0 0.0
    %237 = vmatpush1.msra.mxu0 0.0
    %238 = vmatprep.subr.mxu0 0.0
    %239 = vmatpush1.msra.mxu0 0.0
    %240 = vmatprep.subr.mxu0 0.0
    %241 = vmatpush1.msra.mxu0 0.0
    %242 = vmatprep.subr.mxu0 0.0
    %243 = vmatpush1.msra.mxu0 0.0
    %244 = vmatprep.subr.mxu0 0.0
    %245 = vmatpush1.msra.mxu0 0.0
    %246 = vmatprep.subr.mxu0 0.0
    %247 = vmatpush1.msra.mxu0 0.0
    %248 = vmatprep.subr.mxu0 0.0
    %249 = vmatpush1.msra.mxu0 0.0
    %250 = vmatprep.subr.mxu0 0.0
    %251 = vmatpush1.msra.mxu0 0.0
    %252 = vmatprep.subr.mxu0 0.0
    %253 = vmatpush1.msra.mxu0 0.0
    %254 = vmatprep.mubr.f32.mxu0 0.0
    %255 = vmatmul.mubr.f32.gmra.mrb[0].mxu0 %v188
    %v256 = vpop.f32.mrb[0].mxu0
    %v257 = vadd.f32 0.0, %v256
    %v258 = vpop.f32.mrb[0].mxu0
    %259 = vdwg.mxu0
    %v260 = vrot.slane %v35, 4
    %v261 = vsel %vm186, %v260, 0
    %263 = vmatprep.subr.mxu0 0.0
    %264 = vmatpush1.msra.mxu0 %v21
    %265 = vmatprep.subr.mxu0 0.0
    %266 = vmatpush1.msra.mxu0 0.0
    %267 = vmatprep.subr.mxu0 0.0
    %268 = vmatpush1.msra.mxu0 0.0
    %269 = vmatprep.subr.mxu0 0.0
    %270 = vmatpush1.msra.mxu0 0.0
    %271 = vmatprep.subr.mxu0 0.0
    %272 = vmatpush1.msra.mxu0 0.0
    %273 = vmatprep.subr.mxu0 0.0
    %274 = vmatpush1.msra.mxu0 0.0
    %275 = vmatprep.subr.mxu0 0.0
    %276 = vmatpush1.msra.mxu0 0.0
    %277 = vmatprep.subr.mxu0 0.0
    %278 = vmatpush1.msra.mxu0 0.0
    %279 = vmatprep.subr.mxu0 0.0
    %280 = vmatpush1.msra.mxu0 0.0
    %281 = vmatprep.subr.mxu0 0.0
    %282 = vmatpush1.msra.mxu0 0.0
    %283 = vmatprep.subr.mxu0 0.0
    %284 = vmatpush1.msra.mxu0 0.0
    %285 = vmatprep.subr.mxu0 0.0
    %286 = vmatpush1.msra.mxu0 0.0
    %287 = vmatprep.subr.mxu0 0.0
    %288 = vmatpush1.msra.mxu0 0.0
    %289 = vmatprep.subr.mxu0 0.0
    %290 = vmatpush1.msra.mxu0 0.0
    %291 = vmatprep.subr.mxu0 0.0
    %292 = vmatpush1.msra.mxu0 0.0
    %293 = vmatprep.subr.mxu0 0.0
    %294 = vmatpush1.msra.mxu0 0.0
    %295 = vmatprep.subr.mxu0 0.0
    %296 = vmatpush1.msra.mxu0 0.0
    %297 = vmatprep.subr.mxu0 0.0
    %298 = vmatpush1.msra.mxu0 0.0
    %299 = vmatprep.subr.mxu0 0.0
    %300 = vmatpush1.msra.mxu0 0.0
    %301 = vmatprep.subr.mxu0 0.0
    %302 = vmatpush1.msra.mxu0 0.0
    %303 = vmatprep.subr.mxu0 0.0
    %304 = vmatpush1.msra.mxu0 0.0
    %305 = vmatprep.subr.mxu0 0.0
    %306 = vmatpush1.msra.mxu0 0.0
    %307 = vmatprep.subr.mxu0 0.0
    %308 = vmatpush1.msra.mxu0 0.0
    %309 = vmatprep.subr.mxu0 0.0
    %310 = vmatpush1.msra.mxu0 0.0
    %311 = vmatprep.subr.mxu0 0.0
    %312 = vmatpush1.msra.mxu0 0.0
    %313 = vmatprep.subr.mxu0 0.0
    %314 = vmatpush1.msra.mxu0 0.0
    %315 = vmatprep.subr.mxu0 0.0
    %316 = vmatpush1.msra.mxu0 0.0
    %317 = vmatprep.subr.mxu0 0.0
    %318 = vmatpush1.msra.mxu0 0.0
    %319 = vmatprep.subr.mxu0 0.0
    %320 = vmatpush1.msra.mxu0 0.0
    %321 = vmatprep.subr.mxu0 0.0
    %322 = vmatpush1.msra.mxu0 0.0
    %323 = vmatprep.subr.mxu0 0.0
    %324 = vmatpush1.msra.mxu0 0.0
    %325 = vmatprep.subr.mxu0 0.0
    %326 = vmatpush1.msra.mxu0 0.0
    %327 = vmatprep.mubr.f32.mxu0 0.0
    %328 = vmatmul.mubr.f32.gmra.mrb[0].mxu0 %v261
    %v329 = vpop.f32.mrb[0].mxu0
    %v330 = vadd.f32 0.0, %v329
    %v331 = vpop.f32.mrb[0].mxu0
    %332 = vdwg.mxu0
    %v334 = vsel %vm112, %v330, 0
    %336 = vmatprep.subr.mxu0 0.0
    %337 = vmatpush1.msra.mxu0 %v29
    %338 = vmatprep.subr.mxu0 0.0
    %339 = vmatpush1.msra.mxu0 %v30
    %340 = vmatprep.subr.mxu0 0.0
    %341 = vmatpush1.msra.mxu0 0.0
    %342 = vmatprep.subr.mxu0 0.0
    %343 = vmatpush1.msra.mxu0 0.0
    %344 = vmatprep.subr.mxu0 0.0
    %345 = vmatpush1.msra.mxu0 0.0
    %346 = vmatprep.subr.mxu0 0.0
    %347 = vmatpush1.msra.mxu0 0.0
    %348 = vmatprep.subr.mxu0 0.0
    %349 = vmatpush1.msra.mxu0 0.0
    %350 = vmatprep.subr.mxu0 0.0
    %351 = vmatpush1.msra.mxu0 0.0
    %352 = vmatprep.subr.mxu0 0.0
    %353 = vmatpush1.msra.mxu0 0.0
    %354 = vmatprep.subr.mxu0 0.0
    %355 = vmatpush1.msra.mxu0 0.0
    %356 = vmatprep.subr.mxu0 0.0
    %357 = vmatpush1.msra.mxu0 0.0
    %358 = vmatprep.subr.mxu0 0.0
    %359 = vmatpush1.msra.mxu0 0.0
    %360 = vmatprep.subr.mxu0 0.0
    %361 = vmatpush1.msra.mxu0 0.0
    %362 = vmatprep.subr.mxu0 0.0
    %363 = vmatpush1.msra.mxu0 0.0
    %364 = vmatprep.subr.mxu0 0.0
    %365 = vmatpush1.msra.mxu0 0.0
    %366 = vmatprep.subr.mxu0 0.0
    %367 = vmatpush1.msra.mxu0 0.0
    %368 = vmatprep.subr.mxu0 0.0
    %369 = vmatpush1.msra.mxu0 0.0
    %370 = vmatprep.subr.mxu0 0.0
    %371 = vmatpush1.msra.mxu0 0.0
    %372 = vmatprep.subr.mxu0 0.0
    %373 = vmatpush1.msra.mxu0 0.0
    %374 = vmatprep.subr.mxu0 0.0
    %375 = vmatpush1.msra.mxu0 0.0
    %376 = vmatprep.subr.mxu0 0.0
    %377 = vmatpush1.msra.mxu0 0.0
    %378 = vmatprep.subr.mxu0 0.0
    %379 = vmatpush1.msra.mxu0 0.0
    %380 = vmatprep.subr.mxu0 0.0
    %381 = vmatpush1.msra.mxu0 0.0
    %382 = vmatprep.subr.mxu0 0.0
    %383 = vmatpush1.msra.mxu0 0.0
    %384 = vmatprep.subr.mxu0 0.0
    %385 = vmatpush1.msra.mxu0 0.0
    %386 = vmatprep.subr.mxu0 0.0
    %387 = vmatpush1.msra.mxu0 0.0
    %388 = vmatprep.subr.mxu0 0.0
    %389 = vmatpush1.msra.mxu0 0.0
    %390 = vmatprep.subr.mxu0 0.0
    %391 = vmatpush1.msra.mxu0 0.0
    %392 = vmatprep.subr.mxu0 0.0
    %393 = vmatpush1.msra.mxu0 0.0
    %394 = vmatprep.subr.mxu0 0.0
    %395 = vmatpush1.msra.mxu0 0.0
    %396 = vmatprep.subr.mxu0 0.0
    %397 = vmatpush1.msra.mxu0 0.0
    %398 = vmatprep.subr.mxu0 0.0
    %399 = vmatpush1.msra.mxu0 0.0
    %400 = vmatprep.mubr.f32.mxu0 0.0
    %401 = vmatmul.mubr.f32.gmra.mrb[0].mxu0 %v334
    %v402 = vpop.f32.mrb[0].mxu0
    %v403 = vadd.f32 0.0, %v402
    %v404 = vpop.f32.mrb[0].mxu0
    %405 = vdwg.mxu0
    %v407 = vsel %vm112, %v257, 0
    %409 = vmatprep.subr.mxu0 0.0
    %410 = vmatpush1.msra.mxu0 %v27
    %411 = vmatprep.subr.mxu0 0.0
    %412 = vmatpush1.msra.mxu0 %v28
    %413 = vmatprep.subr.mxu0 0.0
    %414 = vmatpush1.msra.mxu0 0.0
    %415 = vmatprep.subr.mxu0 0.0
    %416 = vmatpush1.msra.mxu0 0.0
    %417 = vmatprep.subr.mxu0 0.0
    %418 = vmatpush1.msra.mxu0 0.0
    %419 = vmatprep.subr.mxu0 0.0
    %420 = vmatpush1.msra.mxu0 0.0
    %421 = vmatprep.subr.mxu0 0.0
    %422 = vmatpush1.msra.mxu0 0.0
    %423 = vmatprep.subr.mxu0 0.0
    %424 = vmatpush1.msra.mxu0 0.0
    %425 = vmatprep.subr.mxu0 0.0
    %426 = vmatpush1.msra.mxu0 0.0
    %427 = vmatprep.subr.mxu0 0.0
    %428 = vmatpush1.msra.mxu0 0.0
    %429 = vmatprep.subr.mxu0 0.0
    %430 = vmatpush1.msra.mxu0 0.0
    %431 = vmatprep.subr.mxu0 0.0
    %432 = vmatpush1.msra.mxu0 0.0
    %433 = vmatprep.subr.mxu0 0.0
    %434 = vmatpush1.msra.mxu0 0.0
    %435 = vmatprep.subr.mxu0 0.0
    %436 = vmatpush1.msra.mxu0 0.0
    %437 = vmatprep.subr.mxu0 0.0
    %438 = vmatpush1.msra.mxu0 0.0
    %439 = vmatprep.subr.mxu0 0.0
    %440 = vmatpush1.msra.mxu0 0.0
    %441 = vmatprep.subr.mxu0 0.0
    %442 = vmatpush1.msra.mxu0 0.0
    %443 = vmatprep.subr.mxu0 0.0
    %444 = vmatpush1.msra.mxu0 0.0
    %445 = vmatprep.subr.mxu0 0.0
    %446 = vmatpush1.msra.mxu0 0.0
    %447 = vmatprep.subr.mxu0 0.0
    %448 = vmatpush1.msra.mxu0 0.0
    %449 = vmatprep.subr.mxu0 0.0
    %450 = vmatpush1.msra.mxu0 0.0
    %451 = vmatprep.subr.mxu0 0.0
    %452 = vmatpush1.msra.mxu0 0.0
    %453 = vmatprep.subr.mxu0 0.0
    %454 = vmatpush1.msra.mxu0 0.0
    %455 = vmatprep.subr.mxu0 0.0
    %456 = vmatpush1.msra.mxu0 0.0
    %457 = vmatprep.subr.mxu0 0.0
    %458 = vmatpush1.msra.mxu0 0.0
    %459 = vmatprep.subr.mxu0 0.0
    %460 = vmatpush1.msra.mxu0 0.0
    %461 = vmatprep.subr.mxu0 0.0
    %462 = vmatpush1.msra.mxu0 0.0
    %463 = vmatprep.subr.mxu0 0.0
    %464 = vmatpush1.msra.mxu0 0.0
    %465 = vmatprep.subr.mxu0 0.0
    %466 = vmatpush1.msra.mxu0 0.0
    %467 = vmatprep.subr.mxu0 0.0
    %468 = vmatpush1.msra.mxu0 0.0
    %469 = vmatprep.subr.mxu0 0.0
    %470 = vmatpush1.msra.mxu0 0.0
    %471 = vmatprep.subr.mxu0 0.0
    %472 = vmatpush1.msra.mxu0 0.0
    %473 = vmatprep.mubr.f32.mxu0 0.0
    %474 = vmatmul.mubr.f32.gmra.mrb[0].mxu0 %v407
    %v475 = vpop.f32.mrb[0].mxu0
    %v476 = vadd.f32 %v403, %v475
    %v477 = vpop.f32.mrb[0].mxu0
    %478 = vdwg.mxu0
    %v480 = vrot.slane %v476, 4
    %vm482 = vcmask 1043456
    %v483 = vsel %vm482, %v22, %v480
    %v484 = vadd.f32 %v483, %v183
    %v485 = vadd.f32 %v484, %v33
    %487 = vrot.lane.b32.xlu0 %v485, 1
    %v488 = vpop.permute.xlu0 %487
    %vm490 = vcmask 7168
    %v491 = vsel %vm490, 0.0, %v488
    %vm492 = vcmask 269312
    %v493 = vsel %vm492, %v491, 0.0
    %v494 = vlaneseq
    %v495 = vshrl.u32 %v494, 7
    %v496 = vsub.s32 0, %v495
    %v497 = vrot.slane %v34, %v496
    %v498 = vmul.f32 %v493, %v497
    %v499 = vlaneseq
    %v500 = vshrl.u32 %v499, 7
    %v501 = vsub.s32 1, %v500
    %v502 = vrot.slane %v34, %v501
    %504 = vrot.lane.b32.xlu0 %v502, 2
    %v505 = vpop.permute.xlu0 %504
    %v507 = vmul.f32 %v493, %v505
    %509 = vrot.lane.b32.xlu0 %v507, 126
    %v510 = vpop.permute.xlu0 %509
    %vm512 = vcmask 203776
    %v514 = vsel %vm512, %v37, 0
    %vm516 = vcmask 1040384
    %v518 = vsel %vm516, 1.0, 0
    %520 = vmatprep.subr.mxu0 0.0
    %521 = vmatpush1.msra.mxu0 %v498
    %522 = vmatprep.subr.mxu0 0.0
    %523 = vmatpush1.msra.mxu0 %v485
    %524 = vmatprep.subr.mxu0 0.0
    %525 = vmatpush1.msra.mxu0 %v510
    %526 = vmatprep.subr.mxu0 0.0
    %527 = vmatpush1.msra.mxu0 %v518
    %528 = vmatprep.subr.mxu0 0.0
    %529 = vmatpush1.msra.mxu0 0.0
    %530 = vmatprep.subr.mxu0 0.0
    %531 = vmatpush1.msra.mxu0 0.0
    %532 = vmatprep.subr.mxu0 0.0
    %533 = vmatpush1.msra.mxu0 0.0
    %534 = vmatprep.subr.mxu0 0.0
    %535 = vmatpush1.msra.mxu0 0.0
    %536 = vmatprep.subr.mxu0 0.0
    %537 = vmatpush1.msra.mxu0 0.0
    %538 = vmatprep.subr.mxu0 0.0
    %539 = vmatpush1.msra.mxu0 0.0
    %540 = vmatprep.subr.mxu0 0.0
    %541 = vmatpush1.msra.mxu0 0.0
    %542 = vmatprep.subr.mxu0 0.0
    %543 = vmatpush1.msra.mxu0 0.0
    %544 = vmatprep.subr.mxu0 0.0
    %545 = vmatpush1.msra.mxu0 0.0
    %546 = vmatprep.subr.mxu0 0.0
    %547 = vmatpush1.msra.mxu0 0.0
    %548 = vmatprep.subr.mxu0 0.0
    %549 = vmatpush1.msra.mxu0 0.0
    %550 = vmatprep.subr.mxu0 0.0
    %551 = vmatpush1.msra.mxu0 0.0
    %552 = vmatprep.subr.mxu0 0.0
    %553 = vmatpush1.msra.mxu0 0.0
    %554 = vmatprep.subr.mxu0 0.0
    %555 = vmatpush1.msra.mxu0 0.0
    %556 = vmatprep.subr.mxu0 0.0
    %557 = vmatpush1.msra.mxu0 0.0
    %558 = vmatprep.subr.mxu0 0.0
    %559 = vmatpush1.msra.mxu0 0.0
    %560 = vmatprep.subr.mxu0 0.0
    %561 = vmatpush1.msra.mxu0 0.0
    %562 = vmatprep.subr.mxu0 0.0
    %563 = vmatpush1.msra.mxu0 0.0
    %564 = vmatprep.subr.mxu0 0.0
    %565 = vmatpush1.msra.mxu0 0.0
    %566 = vmatprep.subr.mxu0 0.0
    %567 = vmatpush1.msra.mxu0 0.0
    %568 = vmatprep.subr.mxu0 0.0
    %569 = vmatpush1.msra.mxu0 0.0
    %570 = vmatprep.subr.mxu0 0.0
    %571 = vmatpush1.msra.mxu0 0.0
    %572 = vmatprep.subr.mxu0 0.0
    %573 = vmatpush1.msra.mxu0 0.0
    %574 = vmatprep.subr.mxu0 0.0
    %575 = vmatpush1.msra.mxu0 0.0
    %576 = vmatprep.subr.mxu0 0.0
    %577 = vmatpush1.msra.mxu0 0.0
    %578 = vmatprep.subr.mxu0 0.0
    %579 = vmatpush1.msra.mxu0 0.0
    %580 = vmatprep.subr.mxu0 0.0
    %581 = vmatpush1.msra.mxu0 0.0
    %582 = vmatprep.subr.mxu0 0.0
    %583 = vmatpush1.msra.mxu0 0.0
    %584 = vmatprep.mubr.f32.mxu0 0.0
    %585 = vmatmul.mubr.f32.gmra.mrb[0].mxu0 %v514
    %v586 = vpop.f32.mrb[0].mxu0
    %v587 = vadd.f32 0.0, %v586
    %v588 = vpop.f32.mrb[0].mxu0
    %589 = vdwg.mxu0
    %v590 = vmax.f32 %v587, 0.0
    %592 = vrot.lane.b32.xlu0 %v590, 1
    %v593 = vpop.permute.xlu0 %592
    %v595 = vsel %vm490, 0.0, %v593
    %v596 = vsel %vm492, %v595, 0.0
    %v597 = vmul.f32 %v596, %v497
    %v598 = vmul.f32 %v596, %v505
    %v599 = vrot.slane %v590, 4
    %602 = vrot.lane.b32.xlu0 %v598, 126
    %v603 = vpop.permute.xlu0 %602
    %v605 = vsel %vm482, %v597, %v599
    %v606 = vsel %vm482, %v603, 1.0
    %v607 = vrot.slane %v37, 4
    %vm608 = vcmask 105472
    %v609 = vsel %vm608, %v607, 0
    %vm611 = vcmask 1044480
    %v613 = vsel %vm611, %v606, 0
    %615 = vmatprep.subr.mxu0 0.0
    %616 = vmatpush1.msra.mxu0 %v605
    %617 = vmatprep.subr.mxu0 0.0
    %618 = vmatpush1.msra.mxu0 %v613
    %619 = vmatprep.subr.mxu0 0.0
    %620 = vmatpush1.msra.mxu0 0.0
    %621 = vmatprep.subr.mxu0 0.0
    %622 = vmatpush1.msra.mxu0 0.0
    %623 = vmatprep.subr.mxu0 0.0
    %624 = vmatpush1.msra.mxu0 0.0
    %625 = vmatprep.subr.mxu0 0.0
    %626 = vmatpush1.msra.mxu0 0.0
    %627 = vmatprep.subr.mxu0 0.0
    %628 = vmatpush1.msra.mxu0 0.0
    %629 = vmatprep.subr.mxu0 0.0
    %630 = vmatpush1.msra.mxu0 0.0
    %631 = vmatprep.subr.mxu0 0.0
    %632 = vmatpush1.msra.mxu0 0.0
    %633 = vmatprep.subr.mxu0 0.0
    %634 = vmatpush1.msra.mxu0 0.0
    %635 = vmatprep.subr.mxu0 0.0
    %636 = vmatpush1.msra.mxu0 0.0
    %637 = vmatprep.subr.mxu0 0.0
    %638 = vmatpush1.msra.mxu0 0.0
    %639 = vmatprep.subr.mxu0 0.0
    %640 = vmatpush1.msra.mxu0 0.0
    %641 = vmatprep.subr.mxu0 0.0
    %642 = vmatpush1.msra.mxu0 0.0
    %643 = vmatprep.subr.mxu0 0.0
    %644 = vmatpush1.msra.mxu0 0.0
    %645 = vmatprep.subr.mxu0 0.0
    %646 = vmatpush1.msra.mxu0 0.0
    %647 = vmatprep.subr.mxu0 0.0
    %648 = vmatpush1.msra.mxu0 0.0
    %649 = vmatprep.subr.mxu0 0.0
    %650 = vmatpush1.msra.mxu0 0.0
    %651 = vmatprep.subr.mxu0 0.0
    %652 = vmatpush1.msra.mxu0 0.0
    %653 = vmatprep.subr.mxu0 0.0
    %654 = vmatpush1.msra.mxu0 0.0
    %655 = vmatprep.subr.mxu0 0.0
    %656 = vmatpush1.msra.mxu0 0.0
    %657 = vmatprep.subr.mxu0 0.0
    %658 = vmatpush1.msra.mxu0 0.0
    %659 = vmatprep.subr.mxu0 0.0
    %660 = vmatpush1.msra.mxu0 0.0
    %661 = vmatprep.subr.mxu0 0.0
    %662 = vmatpush1.msra.mxu0 0.0
    %663 = vmatprep.subr.mxu0 0.0
    %664 = vmatpush1.msra.mxu0 0.0
    %665 = vmatprep.subr.mxu0 0.0
    %666 = vmatpush1.msra.mxu0 0.0
    %667 = vmatprep.subr.mxu0 0.0
    %668 = vmatpush1.msra.mxu0 0.0
    %669 = vmatprep.subr.mxu0 0.0
    %670 = vmatpush1.msra.mxu0 0.0
    %671 = vmatprep.subr.mxu0 0.0
    %672 = vmatpush1.msra.mxu0 0.0
    %673 = vmatprep.subr.mxu0 0.0
    %674 = vmatpush1.msra.mxu0 0.0
    %675 = vmatprep.subr.mxu0 0.0
    %676 = vmatpush1.msra.mxu0 0.0
    %677 = vmatprep.subr.mxu0 0.0
    %678 = vmatpush1.msra.mxu0 0.0
    %679 = vmatprep.mubr.f32.mxu0 0.0
    %680 = vmatmul.mubr.f32.gmra.mrb[0].mxu0 %v609
    %v681 = vpop.f32.mrb[0].mxu0
    %v682 = vadd.f32 0.0, %v681
    %v683 = vpop.f32.mrb[0].mxu0
    %684 = vdwg.mxu0
    %v685 = vmax.f32 %v682, 0.0
    %vm686 = vcmask 257024
    %687 = vst.msk [vmem:[#allocation2] sm:$0xf] %vm686, %v685
    // Predicated region
    $region22: #{tpu_custom_call.1} parent=1 // pred_check
      _
    $region23: #{tpu_custom_call.1} parent=1 // pred_check_branch
      %689 = sbr.rel (0) target = $region25
    $region24: #{tpu_custom_call.1} parent=1 // pred_region
      %s691 = ssub.s32 64, 64
      %692 = vsyncadd [#allocation3], %s691
      %s694 = sshll.u32 [#allocation2], 4
      %s695 = int_to_ptr.vmem [resolvable:$true] %s694
      %697 = dma.vmem_to_hbm [thread:$0]  %s695, 64, %s5, [#allocation3]
    $region25: #{tpu_custom_call.1} parent=1 // pred_fallthru
      _
    // Predicated region
    $region26: #{tpu_custom_call.1} parent=1 // pred_check
      _
    $region27: #{tpu_custom_call.1} parent=1 // pred_check_branch
      %699 = sbr.rel (0) target = $region29
    $region28: #{tpu_custom_call.1} parent=1 // pred_region
      %700 = dma.done [#allocation3], 64
    $region29: #{tpu_custom_call.1} parent=1 // pred_fallthru
      _
    %701 = vsyncpa [#allocation3], 1

</llo_original>
